<compile_context>
chip_gen: v6e
topology: v6e:2x2x1
jax: 0.10.0
libtpu: 0.0.40
codegen_flags: <defaults>
</compile_context>

<pallas_src>
import functools
import math

import jax
import jax.numpy as jnp
from jax import lax
from jax.experimental import pallas as pl
from jax.experimental.pallas import tpu as pltpu

LANE = 128     # lane width: feature dims zero-padded to this for lane-dense layout
SUBLANE = 8    # f32 sublane granularity


def _round_up(n, m):
    return ((n + m - 1) // m) * m


def _cdiv(a, b):
    return (a + b - 1) // b


def _gelu(x, approximate=False):
    if approximate:
        # tanh-approx GELU: transcendental goes to the EUP slot (overlaps VALU/MXU).
        return jax.nn.gelu(x, approximate=True)
    # PyTorch nn.GELU() default is the exact erf-based GELU.
    return 0.5 * x * (1.0 + lax.erf(x * (1.0 / math.sqrt(2.0))))


def mlp_kernel(x_ref, w_ref, b_ref, o_ref, *, approximate_gelu=False):
    x = x_ref[...]                                    # (TB, 3)
    k_in = x.shape[-1]

    # ---- Layer 1 on the VPU: K=3 unrolled broadcast FMAs (an MXU pass would
    # waste >97% of the array). ----
    h = x[:, 0:1] * w_ref[0, 0:1, :]
    for k in range(1, k_in):
        h = h + x[:, k:k + 1] * w_ref[0, k:k + 1, :]
    h = _gelu(h + b_ref[0:1, :], approximate_gelu)    # (TB, 128); padded lanes stay 0

    # ---- Layers 2/3: lane-dense 128x128 zero-padded f32 MXU matmuls. ----
    h = _gelu(jnp.dot(h, w_ref[1], preferred_element_type=jnp.float32)
              + b_ref[1:2, :], approximate_gelu)
    h = _gelu(jnp.dot(h, w_ref[2], preferred_element_type=jnp.float32)
              + b_ref[2:3, :], approximate_gelu)

    # ---- Layer 4, transposed output: contract both operands on their feature
    # dim so the MXU emits the (8, TB) batch-along-lanes tile directly -- no
    # XLU transpose, unmasked lane-dense store.  Only row 0 is real (rows 1..7
    # of w4^T are zero padding); the bias broadcast also lands in rows 1..7,
    # which the wrapper discards. ----
    w4t = w_ref[3, 0:SUBLANE, :]                      # (8, 128)
    out_t = lax.dot_general(w4t, h, (((1,), (1,)), ((), ())),
                            preferred_element_type=jnp.float32)
    out_t = out_t + b_ref[3:4, 0:1]
    o_ref[...] = out_t.astype(o_ref.dtype)


def pack_params(params, lane=LANE):
    """Zero-pad and pack weights/biases into two lane-dense arrays.

    weights: (4, 128, 128) -- slot 0 holds w1 (rows 0:3), slots 1/2 hold w2/w3,
             slot 3 holds w4^T (row 0).
    biases:  (4, 128)      -- rows 0..2 hold b1..b3, row 3 lane 0 holds b4.

    Zero padding is exact: padded activation lanes stay 0 through GELU
    (gelu(0) = 0) and contribute nothing to subsequent contractions.
    """
    w = jnp.zeros((4, lane, lane), jnp.float32)
    b = jnp.zeros((4, lane), jnp.float32)
    for i in range(3):
        wi = params[f"w{i + 1}"]
        bi = params[f"b{i + 1}"].reshape(-1)
        w = w.at[i, :wi.shape[0], :wi.shape[1]].set(wi)
        b = b.at[i, :bi.shape[0]].set(bi)
    w4 = params["w4"]                                  # (hidden, 1)
    b4 = params["b4"].reshape(-1)                      # (1,)
    w = w.at[3, :w4.shape[1], :w4.shape[0]].set(w4.T)  # store transposed
    b = b.at[3, :b4.shape[0]].set(b4)
    return {"w": w, "b": b}


def _choose_tiling(batch, tile_cap=2048):
    """Pick (tile, grid, padded_batch).

    The transposed output layout puts batch along lanes, so the tile must be a
    multiple of 128.  Keep grid >= 2 whenever the batch allows it (v7x shards
    the 'parallel' axis across its two TensorCores) and bound pad waste to
    less than one tile.
    """
    tile_cap = max(LANE, (int(tile_cap) // LANE) * LANE)
    b128 = _round_up(max(batch, 1), LANE)
    min_grid = 2 if b128 >= 2 * LANE else 1
    n_tiles = max(_cdiv(b128, tile_cap), min_grid)
    tile = _round_up(_cdiv(b128, n_tiles), LANE)
    grid = _cdiv(b128, tile)
    return tile, grid, grid * tile


def _xla_forward(x, packed, approximate_gelu=False):
    """Plain XLA matmul chain for launch-overhead-bound tiny batches."""
    w, b = packed["w"], packed["b"]
    k = x.shape[-1]
    h = _gelu(x @ w[0, :k, :] + b[0], approximate_gelu)
    h = _gelu(h @ w[1] + b[1], approximate_gelu)
    h = _gelu(h @ w[2] + b[2], approximate_gelu)
    return h @ w[3, 0:1, :].T + b[3, 0]


def simple_nn_forward(x, packed, *, batch_tile_cap=2048, approximate_gelu=False,
                      min_pallas_batch=1024, force_kernel=False):
    """x: (B, 3) float32 -> (B, 1) float32.  packed: output of pack_params()."""
    B, K = x.shape

    if B < min_pallas_batch and not force_kernel:
        # At tiny batch the custom call is pure launch overhead; XLA wins.
        return _xla_forward(x, packed, approximate_gelu)

    TB, grid, B_pad = _choose_tiling(B, batch_tile_cap)
    if B_pad != B:
        x = jnp.pad(x, ((0, B_pad - B), (0, 0)))

    w, b = packed["w"], packed["b"]
    vmem = pltpu.MemorySpace.VMEM
    in_specs = [
        pl.BlockSpec((TB, K), lambda i: (i, 0), memory_space=vmem),
        # Weights/biases: constant block index -> stay resident in VMEM.
        pl.BlockSpec(w.shape, lambda i: (0, 0, 0), memory_space=vmem),
        pl.BlockSpec(b.shape, lambda i: (0, 0), memory_space=vmem),
    ]
    # Transposed, lane-dense output slab: (8, B_pad), batch along lanes.
    out_spec = pl.BlockSpec((SUBLANE, TB), lambda i: (0, i), memory_space=vmem)

    flops = 2 * B_pad * (K * LANE + 2 * LANE * LANE + LANE * SUBLANE)
    transcendentals = 3 * B_pad * LANE
    bytes_accessed = int(B_pad * K * 4 + w.size * 4 + b.size * 4
                         + SUBLANE * B_pad * 4)
    cost = pl.CostEstimate(flops=flops, transcendentals=transcendentals,
                           bytes_accessed=bytes_accessed)

    kernel = functools.partial(mlp_kernel, approximate_gelu=approximate_gelu)
    out_t = pl.pallas_call(
        kernel,
        out_shape=jax.ShapeDtypeStruct((SUBLANE, B_pad), jnp.float32),
        grid=(grid,),
        in_specs=in_specs,
        out_specs=out_spec,
        compiler_params=pltpu.CompilerParams(
            dimension_semantics=("parallel",),
            vmem_limit_bytes=32 * 1024 * 1024),
        cost_estimate=cost,
    )(x, w, b)

    # Row 0 holds the real output; un-pad batch and restore (B, 1) shape.
    return out_t[0, :B].reshape(B, 1)


def init_params(key, hidden_size=10):
    """Deterministic init matching PyTorch nn.Linear shapes (logical sizes)."""
    dims = [(3, hidden_size), (hidden_size, hidden_size),
            (hidden_size, hidden_size), (hidden_size, 1)]
    params = {}
    keys = jax.random.split(key, 2 * len(dims))
    for i, (fan_in, fan_out) in enumerate(dims):
        bound = 1.0 / math.sqrt(fan_in)
        params[f"w{i + 1}"] = jax.random.uniform(
            keys[2 * i], (fan_in, fan_out), minval=-bound, maxval=bound,
            dtype=jnp.float32)
        params[f"b{i + 1}"] = jax.random.uniform(
            keys[2 * i + 1], (1, fan_out), minval=-bound, maxval=bound,
            dtype=jnp.float32)
    return params


def reference_forward(x, params):
    h = x
    for i in range(1, 4):
        h = h @ params[f"w{i}"] + params[f"b{i}"]
        h = 0.5 * h * (1.0 + lax.erf(h / math.sqrt(2.0)))
    return h @ params["w4"] + params["b4"]


if __name__ == "__main__":
    key = jax.random.PRNGKey(0)
    k_params, k_x, k_x2 = jax.random.split(key, 3)

    hidden_size = 10
    params = init_params(k_params, hidden_size)
    packed = pack_params(params)

    # Spec-sized batch, forced through the Pallas kernel (grid=1 tile).
    x = jax.random.normal(k_x, (8, 3), dtype=jnp.float32)
    out = simple_nn_forward(x, packed, force_kernel=True)
    jax.block_until_ready(out)
    ref = reference_forward(x, params)
    assert out.shape == (8, 1), out.shape
    assert jnp.allclose(out, ref, atol=1e-5, rtol=1e-5), "kernel mismatch (B=8)"

    # Tiny-batch fast path (plain XLA) agrees too.
    out_fast = simple_nn_forward(x, packed)
    assert jnp.allclose(out_fast, ref, atol=1e-5, rtol=1e-5), "fast path mismatch"

    # Awkward batch: exercises 128-row padding, multi-tile grid and the
    # lane-dense transposed output across >1 grid step.
    x2 = jax.random.normal(k_x2, (300, 3), dtype=jnp.float32)
    out2 = simple_nn_forward(x2, packed, force_kernel=True)
    jax.block_until_ready(out2)
    ref2 = reference_forward(x2, params)
    assert out2.shape == (300, 1), out2.shape
    assert jnp.allclose(out2, ref2, atol=1e-5, rtol=1e-5), "kernel mismatch (B=300)"

    print("KERNEL_OK")
</pallas_src>

<mosaic_0001>
module attributes {stable_mosaic.version = 11 : i64} {
  func.func @mlp_kernel(%arg0: i32, %arg1: memref<128x3xf32, #tpu.memory_space<vmem>>, %arg2: memref<4x128x128xf32, #tpu.memory_space<vmem>>, %arg3: memref<4x128xf32, #tpu.memory_space<vmem>>, %arg4: memref<8x128xf32, #tpu.memory_space<vmem>>) attributes {dimension_semantics = [#tpu.dimension_semantics<parallel>], iteration_bounds = array<i64: 1>, scalar_prefetch = 0 : i64, scratch_operands = 0 : i64, tpu.core_type = #tpu.core_type<tc>, window_params = [{transform_indices = @transform_0, window_bounds = array<i64: 128, 3>}, {pipeline_mode = #tpu.pipeline_mode<synchronous>, transform_indices = @transform_1, window_bounds = array<i64: 4, 128, 128>}, {pipeline_mode = #tpu.pipeline_mode<synchronous>, transform_indices = @transform_2, window_bounds = array<i64: 4, 128>}, {transform_indices = @transform_3, window_bounds = array<i64: 8, 128>}]} {
    %c0 = arith.constant 0 : index
    %c0_0 = arith.constant 0 : index
    %0 = vector.load %arg1[%c0, %c0_0] : memref<128x3xf32, #tpu.memory_space<vmem>>, vector<128x3xf32>
    %1 = vector.extract_strided_slice %0 {offsets = [0, 0], sizes = [128, 1], strides = [1, 1]} : vector<128x3xf32> to vector<128x1xf32>
    %c0_1 = arith.constant 0 : index
    %c0_2 = arith.constant 0 : index
    %c0_3 = arith.constant 0 : index
    %2 = vector.load %arg2[%c0_1, %c0_2, %c0_3] : memref<4x128x128xf32, #tpu.memory_space<vmem>>, vector<1x1x128xf32>
    %3 = vector.shape_cast %2 : vector<1x1x128xf32> to vector<1x128xf32>
    %4 = vector.broadcast %1 : vector<128x1xf32> to vector<128x128xf32>
    %5 = vector.broadcast %3 : vector<1x128xf32> to vector<128x128xf32>
    %6 = arith.mulf %4, %5 : vector<128x128xf32>
    %7 = vector.extract_strided_slice %0 {offsets = [0, 1], sizes = [128, 1], strides = [1, 1]} : vector<128x3xf32> to vector<128x1xf32>
    %c0_4 = arith.constant 0 : index
    %c1 = arith.constant 1 : index
    %c0_5 = arith.constant 0 : index
    %8 = vector.load %arg2[%c0_4, %c1, %c0_5] : memref<4x128x128xf32, #tpu.memory_space<vmem>>, vector<1x1x128xf32>
    %9 = vector.shape_cast %8 : vector<1x1x128xf32> to vector<1x128xf32>
    %10 = vector.broadcast %7 : vector<128x1xf32> to vector<128x128xf32>
    %11 = vector.broadcast %9 : vector<1x128xf32> to vector<128x128xf32>
    %12 = arith.mulf %10, %11 : vector<128x128xf32>
    %13 = arith.addf %6, %12 : vector<128x128xf32>
    %14 = vector.extract_strided_slice %0 {offsets = [0, 2], sizes = [128, 1], strides = [1, 1]} : vector<128x3xf32> to vector<128x1xf32>
    %c0_6 = arith.constant 0 : index
    %c2 = arith.constant 2 : index
    %c0_7 = arith.constant 0 : index
    %15 = vector.load %arg2[%c0_6, %c2, %c0_7] : memref<4x128x128xf32, #tpu.memory_space<vmem>>, vector<1x1x128xf32>
    %16 = vector.shape_cast %15 : vector<1x1x128xf32> to vector<1x128xf32>
    %17 = vector.broadcast %14 : vector<128x1xf32> to vector<128x128xf32>
    %18 = vector.broadcast %16 : vector<1x128xf32> to vector<128x128xf32>
    %19 = arith.mulf %17, %18 : vector<128x128xf32>
    %20 = arith.addf %13, %19 : vector<128x128xf32>
    %c0_8 = arith.constant 0 : index
    %c0_9 = arith.constant 0 : index
    %21 = vector.load %arg3[%c0_8, %c0_9] : memref<4x128xf32, #tpu.memory_space<vmem>>, vector<1x128xf32>
    %22 = vector.broadcast %21 : vector<1x128xf32> to vector<128x128xf32>
    %23 = arith.addf %20, %22 : vector<128x128xf32>
    %cst = arith.constant 5.000000e-01 : f32
    %24 = vector.broadcast %cst : f32 to vector<128x128xf32>
    %25 = arith.mulf %24, %23 : vector<128x128xf32>
    %cst_10 = arith.constant 0.707106769 : f32
    %26 = vector.broadcast %cst_10 : f32 to vector<128x128xf32>
    %27 = arith.mulf %23, %26 : vector<128x128xf32>
    %28 = math.erf %27 : vector<128x128xf32>
    %cst_11 = arith.constant 1.000000e+00 : f32
    %29 = vector.broadcast %cst_11 : f32 to vector<128x128xf32>
    %30 = arith.addf %29, %28 : vector<128x128xf32>
    %31 = arith.mulf %25, %30 : vector<128x128xf32>
    %c1_12 = arith.constant 1 : index
    %c0_13 = arith.constant 0 : index
    %c0_14 = arith.constant 0 : index
    %32 = vector.load %arg2[%c1_12, %c0_13, %c0_14] : memref<4x128x128xf32, #tpu.memory_space<vmem>>, vector<1x128x128xf32>
    %33 = vector.shape_cast %32 : vector<1x128x128xf32> to vector<128x128xf32>
    %cst_15 = arith.constant dense<0.000000e+00> : vector<128x128xf32>
    %34 = tpu.matmul %31, %33, %cst_15 {dimension_numbers = #tpu.dot_dimension_numbers<[1], [0], [0], [1], [0, 0, 1, 1], [], []>} : vector<128x128xf32>, vector<128x128xf32>, vector<128x128xf32> -> vector<128x128xf32>
    %c1_16 = arith.constant 1 : index
    %c0_17 = arith.constant 0 : index
    %35 = vector.load %arg3[%c1_16, %c0_17] : memref<4x128xf32, #tpu.memory_space<vmem>>, vector<1x128xf32>
    %36 = vector.broadcast %35 : vector<1x128xf32> to vector<128x128xf32>
    %37 = arith.addf %34, %36 : vector<128x128xf32>
    %cst_18 = arith.constant 5.000000e-01 : f32
    %38 = vector.broadcast %cst_18 : f32 to vector<128x128xf32>
    %39 = arith.mulf %38, %37 : vector<128x128xf32>
    %cst_19 = arith.constant 0.707106769 : f32
    %40 = vector.broadcast %cst_19 : f32 to vector<128x128xf32>
    %41 = arith.mulf %37, %40 : vector<128x128xf32>
    %42 = math.erf %41 : vector<128x128xf32>
    %cst_20 = arith.constant 1.000000e+00 : f32
    %43 = vector.broadcast %cst_20 : f32 to vector<128x128xf32>
    %44 = arith.addf %43, %42 : vector<128x128xf32>
    %45 = arith.mulf %39, %44 : vector<128x128xf32>
    %c2_21 = arith.constant 2 : index
    %c0_22 = arith.constant 0 : index
    %c0_23 = arith.constant 0 : index
    %46 = vector.load %arg2[%c2_21, %c0_22, %c0_23] : memref<4x128x128xf32, #tpu.memory_space<vmem>>, vector<1x128x128xf32>
    %47 = vector.shape_cast %46 : vector<1x128x128xf32> to vector<128x128xf32>
    %cst_24 = arith.constant dense<0.000000e+00> : vector<128x128xf32>
    %48 = tpu.matmul %45, %47, %cst_24 {dimension_numbers = #tpu.dot_dimension_numbers<[1], [0], [0], [1], [0, 0, 1, 1], [], []>} : vector<128x128xf32>, vector<128x128xf32>, vector<128x128xf32> -> vector<128x128xf32>
    %c2_25 = arith.constant 2 : index
    %c0_26 = arith.constant 0 : index
    %49 = vector.load %arg3[%c2_25, %c0_26] : memref<4x128xf32, #tpu.memory_space<vmem>>, vector<1x128xf32>
    %50 = vector.broadcast %49 : vector<1x128xf32> to vector<128x128xf32>
    %51 = arith.addf %48, %50 : vector<128x128xf32>
    %cst_27 = arith.constant 5.000000e-01 : f32
    %52 = vector.broadcast %cst_27 : f32 to vector<128x128xf32>
    %53 = arith.mulf %52, %51 : vector<128x128xf32>
    %cst_28 = arith.constant 0.707106769 : f32
    %54 = vector.broadcast %cst_28 : f32 to vector<128x128xf32>
    %55 = arith.mulf %51, %54 : vector<128x128xf32>
    %56 = math.erf %55 : vector<128x128xf32>
    %cst_29 = arith.constant 1.000000e+00 : f32
    %57 = vector.broadcast %cst_29 : f32 to vector<128x128xf32>
    %58 = arith.addf %57, %56 : vector<128x128xf32>
    %59 = arith.mulf %53, %58 : vector<128x128xf32>
    %c3 = arith.constant 3 : index
    %c0_30 = arith.constant 0 : index
    %c0_31 = arith.constant 0 : index
    %60 = vector.load %arg2[%c3, %c0_30, %c0_31] : memref<4x128x128xf32, #tpu.memory_space<vmem>>, vector<1x8x128xf32>
    %61 = vector.shape_cast %60 : vector<1x8x128xf32> to vector<8x128xf32>
    %cst_32 = arith.constant dense<0.000000e+00> : vector<8x128xf32>
    %62 = tpu.matmul %61, %59, %cst_32 {dimension_numbers = #tpu.dot_dimension_numbers<[1], [1], [0], [0], [0, 0, 1, 0], [], []>} : vector<8x128xf32>, vector<128x128xf32>, vector<8x128xf32> -> vector<8x128xf32>
    %c3_33 = arith.constant 3 : index
    %c0_34 = arith.constant 0 : index
    %63 = vector.load %arg3[%c3_33, %c0_34] : memref<4x128xf32, #tpu.memory_space<vmem>>, vector<1x1xf32>
    %64 = vector.broadcast %63 : vector<1x1xf32> to vector<8x128xf32>
    %65 = arith.addf %62, %64 : vector<8x128xf32>
    %c0_35 = arith.constant 0 : index
    %c0_36 = arith.constant 0 : index
    %66 = vector.load %arg4[%c0_35, %c0_36] : memref<8x128xf32, #tpu.memory_space<vmem>>, vector<8x128xf32>
    tpu.vector_store %arg4[%c0_35, %c0_36], %65 {strides = array<i32>} : memref<8x128xf32, #tpu.memory_space<vmem>>, vector<8x128xf32>,
    return
  }
  func.func @transform_0(%arg0: i32) -> (i32, i32) {
    %c0_i32 = arith.constant 0 : i32
    %c0_i32_0 = arith.constant 0 : i32
    return %arg0, %c0_i32 : i32, i32
  }
  func.func @transform_1(%arg0: i32) -> (i32, i32, i32) {
    %c0_i32 = arith.constant 0 : i32
    %c0_i32_0 = arith.constant 0 : i32
    %c0_i32_1 = arith.constant 0 : i32
    %c0_i32_2 = arith.constant 0 : i32
    return %c0_i32, %c0_i32_0, %c0_i32_1 : i32, i32, i32
  }
  func.func @transform_2(%arg0: i32) -> (i32, i32) {
    %c0_i32 = arith.constant 0 : i32
    %c0_i32_0 = arith.constant 0 : i32
    %c0_i32_1 = arith.constant 0 : i32
    return %c0_i32, %c0_i32_0 : i32, i32
  }
  func.func @transform_3(%arg0: i32) -> (i32, i32) {
    %c0_i32 = arith.constant 0 : i32
    %c0_i32_0 = arith.constant 0 : i32
    return %c0_i32, %arg0 : i32, i32
  }
}

</mosaic_0001>

<llo_original>
// kernel: tpu_custom_call.1
$region0: #{tpu_custom_call.1}
  #allocation0 [shape = 'u32[]', space=smem, size = 0x4, offset = 0x4, fixed_abs, tag = 'smem constant byte address 0x4 - core index']
  #allocation1 [shape = 'u32[144,128]{1,0:T(1,128)}', space=vmem, size = 0x12000, scoped, tag = 'internal scratch']
  %s0 = inlined_call_operand.vmem [shape: f32[128,3], index: 0, kind: input, shape index: {}]
  %s1 = inlined_call_operand.hbm [shape: f32[4,128,128], index: 1, kind: input, shape index: {}]
  %s2 = inlined_call_operand.vmem [shape: f32[4,128], index: 2, kind: input, shape index: {}]
  %s3 = inlined_call_operand.hbm [shape: f32[8,128], index: 3, kind: output, shape index: {}]
  %s4 = sld [smem:[#allocation0]]
  $region26: #{tpu_custom_call.1} parent=0
    _
  %s6 = ssub.s32 1, %s4
  %s7 = scalar_select 0, %s6, %s4
  $region1: #{tpu_custom_call.1} parent=0
    #allocation2 [shape = 'u8[262144]{0}', space=vmem, size = 0x40000, scoped, tag = 'input window, operand 1, single buffered']
    #allocation3 [shape = 's32[1]{0}', space=sflag, size = 0x4, scoped, tag = 'scoped memory for tpu_custom_call.1']
    #allocation4 [shape = 's32[1]{0}', space=sflag, size = 0x4, scoped, tag = 'scoped memory for tpu_custom_call.1']
    #allocation5 [shape = 'u8[4096]{0}', space=vmem, size = 0x1000, scoped, tag = 'output window, operand 0, single buffered']
    %8 = vsyncpa [#allocation3], 0
    %9 = vsyncpa [#allocation4], 0
    // Predicated region
    $region2: #{tpu_custom_call.1} parent=1 // pred_check
      _
    $region3: #{tpu_custom_call.1} parent=1 // pred_check_branch
      %11 = sbr.rel (0) target = $region5
    $region4: #{tpu_custom_call.1} parent=1 // pred_region
      _
    $region5: #{tpu_custom_call.1} parent=1 // pred_fallthru
      _
    // Predicated region
    $region6: #{tpu_custom_call.1} parent=1 // pred_check
      _
    $region7: #{tpu_custom_call.1} parent=1 // pred_check_branch
      %13 = sbr.rel (0) target = $region9
    $region8: #{tpu_custom_call.1} parent=1 // pred_region
      %s15 = ssub.s32 8192, 8192
      %16 = vsyncadd [#allocation3], %s15
      %s17 = sshll.u32 [#allocation2], 4
      %s18 = int_to_ptr.vmem [resolvable:$true] %s17
      %23 = dma.hbm_to_vmem [thread:$0]  %s1, 8192, %s18, [#allocation3], 128, 128, 8
    $region9: #{tpu_custom_call.1} parent=1 // pred_fallthru
      _
    // Predicated region
    $region10: #{tpu_custom_call.1} parent=1 // pred_check
      _
    $region11: #{tpu_custom_call.1} parent=1 // pred_check_branch
      %25 = sbr.rel (0) target = $region13
    $region12: #{tpu_custom_call.1} parent=1 // pred_region
      _
    $region13: #{tpu_custom_call.1} parent=1 // pred_fallthru
      _
    // Predicated region
    $region14: #{tpu_custom_call.1} parent=1 // pred_check
      _
    $region15: #{tpu_custom_call.1} parent=1 // pred_check_branch
      %27 = sbr.rel (0) target = $region17
    $region16: #{tpu_custom_call.1} parent=1 // pred_region
      %28 = dma.done [#allocation3], 8192
    $region17: #{tpu_custom_call.1} parent=1 // pred_fallthru
      _
    %v29 = vld [vmem:[%s0] sm:$0xff]
    %v30 = vld [vmem:[%s0 + $0x8] sm:$0xff]
    %v31 = vld [vmem:[%s0 + $0x10] sm:$0xff]
    %v32 = vld [vmem:[%s0 + $0x18] sm:$0xff]
    %v33 = vld [vmem:[%s0 + $0x20] sm:$0xff]
    %v34 = vld [vmem:[%s0 + $0x28] sm:$0xff]
    %v35 = vld [vmem:[%s0 + $0x30] sm:$0xff]
    %v36 = vld [vmem:[%s0 + $0x38] sm:$0xff]
    %v37 = vld [vmem:[%s0 + $0x40] sm:$0xff]
    %v38 = vld [vmem:[%s0 + $0x48] sm:$0xff]
    %v39 = vld [vmem:[%s0 + $0x50] sm:$0xff]
    %v40 = vld [vmem:[%s0 + $0x58] sm:$0xff]
    %v41 = vld [vmem:[%s0 + $0x60] sm:$0xff]
    %v42 = vld [vmem:[%s0 + $0x68] sm:$0xff]
    %v43 = vld [vmem:[%s0 + $0x70] sm:$0xff]
    %v44 = vld [vmem:[%s0 + $0x78] sm:$0xff]
    %v45 = vld [vmem:[#allocation2] sm:$0x1]
    %47 = vset.pattern.permute.xlu0 0
    %48 = vperm.xlu0 %47, %v29
    %v49 = vpop.permute.xlu0 %48
    %52 = vset.pattern.permute.xlu0 0
    %53 = vperm.xlu0 %52, %v30
    %v54 = vpop.permute.xlu0 %53
    %57 = vset.pattern.permute.xlu0 0
    %58 = vperm.xlu0 %57, %v31
    %v59 = vpop.permute.xlu0 %58
    %62 = vset.pattern.permute.xlu0 0
    %63 = vperm.xlu0 %62, %v32
    %v64 = vpop.permute.xlu0 %63
    %67 = vset.pattern.permute.xlu0 0
    %68 = vperm.xlu0 %67, %v33
    %v69 = vpop.permute.xlu0 %68
    %72 = vset.pattern.permute.xlu0 0
    %73 = vperm.xlu0 %72, %v34
    %v74 = vpop.permute.xlu0 %73
    %77 = vset.pattern.permute.xlu0 0
    %78 = vperm.xlu0 %77, %v35
    %v79 = vpop.permute.xlu0 %78
    %82 = vset.pattern.permute.xlu0 0
    %83 = vperm.xlu0 %82, %v36
    %v84 = vpop.permute.xlu0 %83
    %87 = vset.pattern.permute.xlu0 0
    %88 = vperm.xlu0 %87, %v37
    %v89 = vpop.permute.xlu0 %88
    %92 = vset.pattern.permute.xlu0 0
    %93 = vperm.xlu0 %92, %v38
    %v94 = vpop.permute.xlu0 %93
    %97 = vset.pattern.permute.xlu0 0
    %98 = vperm.xlu0 %97, %v39
    %v99 = vpop.permute.xlu0 %98
    %102 = vset.pattern.permute.xlu0 0
    %103 = vperm.xlu0 %102, %v40
    %v104 = vpop.permute.xlu0 %103
    %107 = vset.pattern.permute.xlu0 0
    %108 = vperm.xlu0 %107, %v41
    %v109 = vpop.permute.xlu0 %108
    %112 = vset.pattern.permute.xlu0 0
    %113 = vperm.xlu0 %112, %v42
    %v114 = vpop.permute.xlu0 %113
    %117 = vset.pattern.permute.xlu0 0
    %118 = vperm.xlu0 %117, %v43
    %v119 = vpop.permute.xlu0 %118
    %122 = vset.pattern.permute.xlu0 0
    %123 = vperm.xlu0 %122, %v44
    %v124 = vpop.permute.xlu0 %123
    %v126 = vlaneseq
    %v127 = vshrl.u32 %v126, 7
    %v128 = vsub.s32 0, %v127
    %v129 = vrot.slane %v45, %v128
    %v130 = vmul.f32 %v49, %v129
    %v131 = vmul.f32 %v54, %v129
    %v132 = vmul.f32 %v59, %v129
    %v133 = vmul.f32 %v64, %v129
    %v134 = vmul.f32 %v69, %v129
    %v135 = vmul.f32 %v74, %v129
    %v136 = vmul.f32 %v79, %v129
    %v137 = vmul.f32 %v84, %v129
    %v138 = vmul.f32 %v89, %v129
    %v139 = vmul.f32 %v94, %v129
    %v140 = vmul.f32 %v99, %v129
    %v141 = vmul.f32 %v104, %v129
    %v142 = vmul.f32 %v109, %v129
    %v143 = vmul.f32 %v114, %v129
    %v144 = vmul.f32 %v119, %v129
    %v145 = vmul.f32 %v124, %v129
    %v146 = vld [vmem:[#allocation2 + $0x1] sm:$0x1]
    %147 = vset.pattern.permute.xlu0 1
    %148 = vperm.xlu0 %147, %v29
    %v149 = vpop.permute.xlu0 %148
    %151 = vset.pattern.permute.xlu0 1
    %152 = vperm.xlu0 %151, %v30
    %v153 = vpop.permute.xlu0 %152
    %155 = vset.pattern.permute.xlu0 1
    %156 = vperm.xlu0 %155, %v31
    %v157 = vpop.permute.xlu0 %156
    %159 = vset.pattern.permute.xlu0 1
    %160 = vperm.xlu0 %159, %v32
    %v161 = vpop.permute.xlu0 %160
    %163 = vset.pattern.permute.xlu0 1
    %164 = vperm.xlu0 %163, %v33
    %v165 = vpop.permute.xlu0 %164
    %167 = vset.pattern.permute.xlu0 1
    %168 = vperm.xlu0 %167, %v34
    %v169 = vpop.permute.xlu0 %168
    %171 = vset.pattern.permute.xlu0 1
    %172 = vperm.xlu0 %171, %v35
    %v173 = vpop.permute.xlu0 %172
    %175 = vset.pattern.permute.xlu0 1
    %176 = vperm.xlu0 %175, %v36
    %v177 = vpop.permute.xlu0 %176
    %179 = vset.pattern.permute.xlu0 1
    %180 = vperm.xlu0 %179, %v37
    %v181 = vpop.permute.xlu0 %180
    %183 = vset.pattern.permute.xlu0 1
    %184 = vperm.xlu0 %183, %v38
    %v185 = vpop.permute.xlu0 %184
    %187 = vset.pattern.permute.xlu0 1
    %188 = vperm.xlu0 %187, %v39
    %v189 = vpop.permute.xlu0 %188
    %191 = vset.pattern.permute.xlu0 1
    %192 = vperm.xlu0 %191, %v40
    %v193 = vpop.permute.xlu0 %192
    %195 = vset.pattern.permute.xlu0 1
    %196 = vperm.xlu0 %195, %v41
    %v197 = vpop.permute.xlu0 %196
    %199 = vset.pattern.permute.xlu0 1
    %200 = vperm.xlu0 %199, %v42
    %v201 = vpop.permute.xlu0 %200
    %203 = vset.pattern.permute.xlu0 1
    %204 = vperm.xlu0 %203, %v43
    %v205 = vpop.permute.xlu0 %204
    %207 = vset.pattern.permute.xlu0 1
    %208 = vperm.xlu0 %207, %v44
    %v209 = vpop.permute.xlu0 %208
    %v211 = vlaneseq
    %v212 = vshrl.u32 %v211, 7
    %v213 = vsub.s32 0, %v212
    %v214 = vrot.slane %v146, %v213
    %v215 = vmul.f32 %v149, %v214
    %v216 = vmul.f32 %v153, %v214
    %v217 = vmul.f32 %v157, %v214
    %v218 = vmul.f32 %v161, %v214
    %v219 = vmul.f32 %v165, %v214
    %v220 = vmul.f32 %v169, %v214
    %v221 = vmul.f32 %v173, %v214
    %v222 = vmul.f32 %v177, %v214
    %v223 = vmul.f32 %v181, %v214
    %v224 = vmul.f32 %v185, %v214
    %v225 = vmul.f32 %v189, %v214
    %v226 = vmul.f32 %v193, %v214
    %v227 = vmul.f32 %v197, %v214
    %v228 = vmul.f32 %v201, %v214
    %v229 = vmul.f32 %v205, %v214
    %v230 = vmul.f32 %v209, %v214
    %v231 = vadd.f32 %v130, %v215
    %v232 = vadd.f32 %v131, %v216
    %v233 = vadd.f32 %v132, %v217
    %v234 = vadd.f32 %v133, %v218
    %v235 = vadd.f32 %v134, %v219
    %v236 = vadd.f32 %v135, %v220
    %v237 = vadd.f32 %v136, %v221
    %v238 = vadd.f32 %v137, %v222
    %v239 = vadd.f32 %v138, %v223
    %v240 = vadd.f32 %v139, %v224
    %v241 = vadd.f32 %v140, %v225
    %v242 = vadd.f32 %v141, %v226
    %v243 = vadd.f32 %v142, %v227
    %v244 = vadd.f32 %v143, %v228
    %v245 = vadd.f32 %v144, %v229
    %v246 = vadd.f32 %v145, %v230
    %v247 = vld [vmem:[#allocation2 + $0x2] sm:$0x1]
    %248 = vset.pattern.permute.xlu0 2
    %249 = vperm.xlu0 %248, %v29
    %v250 = vpop.permute.xlu0 %249
    %252 = vset.pattern.permute.xlu0 2
    %253 = vperm.xlu0 %252, %v30
    %v254 = vpop.permute.xlu0 %253
    %256 = vset.pattern.permute.xlu0 2
    %257 = vperm.xlu0 %256, %v31
    %v258 = vpop.permute.xlu0 %257
    %260 = vset.pattern.permute.xlu0 2
    %261 = vperm.xlu0 %260, %v32
    %v262 = vpop.permute.xlu0 %261
    %264 = vset.pattern.permute.xlu0 2
    %265 = vperm.xlu0 %264, %v33
    %v266 = vpop.permute.xlu0 %265
    %268 = vset.pattern.permute.xlu0 2
    %269 = vperm.xlu0 %268, %v34
    %v270 = vpop.permute.xlu0 %269
    %272 = vset.pattern.permute.xlu0 2
    %273 = vperm.xlu0 %272, %v35
    %v274 = vpop.permute.xlu0 %273
    %276 = vset.pattern.permute.xlu0 2
    %277 = vperm.xlu0 %276, %v36
    %v278 = vpop.permute.xlu0 %277
    %280 = vset.pattern.permute.xlu0 2
    %281 = vperm.xlu0 %280, %v37
    %v282 = vpop.permute.xlu0 %281
    %284 = vset.pattern.permute.xlu0 2
    %285 = vperm.xlu0 %284, %v38
    %v286 = vpop.permute.xlu0 %285
    %288 = vset.pattern.permute.xlu0 2
    %289 = vperm.xlu0 %288, %v39
    %v290 = vpop.permute.xlu0 %289
    %292 = vset.pattern.permute.xlu0 2
    %293 = vperm.xlu0 %292, %v40
    %v294 = vpop.permute.xlu0 %293
    %296 = vset.pattern.permute.xlu0 2
    %297 = vperm.xlu0 %296, %v41
    %v298 = vpop.permute.xlu0 %297
    %300 = vset.pattern.permute.xlu0 2
    %301 = vperm.xlu0 %300, %v42
    %v302 = vpop.permute.xlu0 %301
    %304 = vset.pattern.permute.xlu0 2
    %305 = vperm.xlu0 %304, %v43
    %v306 = vpop.permute.xlu0 %305
    %308 = vset.pattern.permute.xlu0 2
    %309 = vperm.xlu0 %308, %v44
    %v310 = vpop.permute.xlu0 %309
    %v312 = vlaneseq
    %v313 = vshrl.u32 %v312, 7
    %v314 = vsub.s32 0, %v313
    %v315 = vrot.slane %v247, %v314
    %v316 = vmul.f32 %v250, %v315
    %v317 = vmul.f32 %v254, %v315
    %v318 = vmul.f32 %v258, %v315
    %v319 = vmul.f32 %v262, %v315
    %v320 = vmul.f32 %v266, %v315
    %v321 = vmul.f32 %v270, %v315
    %v322 = vmul.f32 %v274, %v315
    %v323 = vmul.f32 %v278, %v315
    %v324 = vmul.f32 %v282, %v315
    %v325 = vmul.f32 %v286, %v315
    %v326 = vmul.f32 %v290, %v315
    %v327 = vmul.f32 %v294, %v315
    %v328 = vmul.f32 %v298, %v315
    %v329 = vmul.f32 %v302, %v315
    %v330 = vmul.f32 %v306, %v315
    %v331 = vmul.f32 %v310, %v315
    %v332 = vadd.f32 %v231, %v316
    %v333 = vadd.f32 %v232, %v317
    %v334 = vadd.f32 %v233, %v318
    %v335 = vadd.f32 %v234, %v319
    %v336 = vadd.f32 %v235, %v320
    %v337 = vadd.f32 %v236, %v321
    %v338 = vadd.f32 %v237, %v322
    %v339 = vadd.f32 %v238, %v323
    %v340 = vadd.f32 %v239, %v324
    %v341 = vadd.f32 %v240, %v325
    %v342 = vadd.f32 %v241, %v326
    %v343 = vadd.f32 %v242, %v327
    %v344 = vadd.f32 %v243, %v328
    %v345 = vadd.f32 %v244, %v329
    %v346 = vadd.f32 %v245, %v330
    %v347 = vadd.f32 %v246, %v331
    %v348 = vld [vmem:[%s2] sm:$0x1]
    %v349 = vlaneseq
    %v350 = vshrl.u32 %v349, 7
    %v351 = vsub.s32 0, %v350
    %v352 = vrot.slane %v348, %v351
    %v353 = vadd.f32 %v332, %v352
    %v354 = vadd.f32 %v333, %v352
    %v355 = vadd.f32 %v334, %v352
    %v356 = vadd.f32 %v335, %v352
    %v357 = vadd.f32 %v336, %v352
    %v358 = vadd.f32 %v337, %v352
    %v359 = vadd.f32 %v338, %v352
    %v360 = vadd.f32 %v339, %v352
    %v361 = vadd.f32 %v340, %v352
    %v362 = vadd.f32 %v341, %v352
    %v363 = vadd.f32 %v342, %v352
    %v364 = vadd.f32 %v343, %v352
    %v365 = vadd.f32 %v344, %v352
    %v366 = vadd.f32 %v345, %v352
    %v367 = vadd.f32 %v346, %v352
    %v368 = vadd.f32 %v347, %v352
    %v369 = vmul.f32 %v353, 0.5
    %v370 = vmul.f32 %v354, 0.5
    %v371 = vmul.f32 %v355, 0.5
    %v372 = vmul.f32 %v356, 0.5
    %v373 = vmul.f32 %v357, 0.5
    %v374 = vmul.f32 %v358, 0.5
    %v375 = vmul.f32 %v359, 0.5
    %v376 = vmul.f32 %v360, 0.5
    %v377 = vmul.f32 %v361, 0.5
    %v378 = vmul.f32 %v362, 0.5
    %v379 = vmul.f32 %v363, 0.5
    %v380 = vmul.f32 %v364, 0.5
    %v381 = vmul.f32 %v365, 0.5
    %v382 = vmul.f32 %v366, 0.5
    %v383 = vmul.f32 %v367, 0.5
    %v384 = vmul.f32 %v368, 0.5
    %v385 = vmul.f32 %v353, 0.70710677
    %v386 = vmul.f32 %v354, 0.70710677
    %v387 = vmul.f32 %v355, 0.70710677
    %v388 = vmul.f32 %v356, 0.70710677
    %v389 = vmul.f32 %v357, 0.70710677
    %v390 = vmul.f32 %v358, 0.70710677
    %v391 = vmul.f32 %v359, 0.70710677
    %v392 = vmul.f32 %v360, 0.70710677
    %v393 = vmul.f32 %v361, 0.70710677
    %v394 = vmul.f32 %v362, 0.70710677
    %v395 = vmul.f32 %v363, 0.70710677
    %v396 = vmul.f32 %v364, 0.70710677
    %v397 = vmul.f32 %v365, 0.70710677
    %v398 = vmul.f32 %v366, 0.70710677
    %v399 = vmul.f32 %v367, 0.70710677
    %v400 = vmul.f32 %v368, 0.70710677
    %v401 = verf.f32.pop %v385
    %v402 = verf.f32.pop %v386
    %v403 = verf.f32.pop %v387
    %v404 = verf.f32.pop %v388
    %v405 = verf.f32.pop %v389
    %v406 = verf.f32.pop %v390
    %v407 = verf.f32.pop %v391
    %v408 = verf.f32.pop %v392
    %v409 = verf.f32.pop %v393
    %v410 = verf.f32.pop %v394
    %v411 = verf.f32.pop %v395
    %v412 = verf.f32.pop %v396
    %v413 = verf.f32.pop %v397
    %v414 = verf.f32.pop %v398
    %v415 = verf.f32.pop %v399
    %v416 = verf.f32.pop %v400
    %v417 = vadd.f32 %v401, 1.0
    %v418 = vadd.f32 %v402, 1.0
    %v419 = vadd.f32 %v403, 1.0
    %v420 = vadd.f32 %v404, 1.0
    %v421 = vadd.f32 %v405, 1.0
    %v422 = vadd.f32 %v406, 1.0
    %v423 = vadd.f32 %v407, 1.0
    %v424 = vadd.f32 %v408, 1.0
    %v425 = vadd.f32 %v409, 1.0
    %v426 = vadd.f32 %v410, 1.0
    %v427 = vadd.f32 %v411, 1.0
    %v428 = vadd.f32 %v412, 1.0
    %v429 = vadd.f32 %v413, 1.0
    %v430 = vadd.f32 %v414, 1.0
    %v431 = vadd.f32 %v415, 1.0
    %v432 = vadd.f32 %v416, 1.0
    %v433 = vmul.f32 %v369, %v417
    %v434 = vmul.f32 %v370, %v418
    %v435 = vmul.f32 %v371, %v419
    %v436 = vmul.f32 %v372, %v420
    %v437 = vmul.f32 %v373, %v421
    %v438 = vmul.f32 %v374, %v422
    %v439 = vmul.f32 %v375, %v423
    %v440 = vmul.f32 %v376, %v424
    %v441 = vmul.f32 %v377, %v425
    %v442 = vmul.f32 %v378, %v426
    %v443 = vmul.f32 %v379, %v427
    %v444 = vmul.f32 %v380, %v428
    %v445 = vmul.f32 %v381, %v429
    %v446 = vmul.f32 %v382, %v430
    %v447 = vmul.f32 %v383, %v431
    %v448 = vmul.f32 %v384, %v432
    %s449 = scalar_lea.vmem [#allocation2], 128
    %v450 = vld [vmem:[%s449] sm:$0xff]
    %v451 = vld [vmem:[%s449 + $0x8] sm:$0xff]
    %v452 = vld [vmem:[%s449 + $0x10] sm:$0xff]
    %v453 = vld [vmem:[%s449 + $0x18] sm:$0xff]
    %v454 = vld [vmem:[%s449 + $0x20] sm:$0xff]
    %v455 = vld [vmem:[%s449 + $0x28] sm:$0xff]
    %v456 = vld [vmem:[%s449 + $0x30] sm:$0xff]
    %v457 = vld [vmem:[%s449 + $0x38] sm:$0xff]
    %v458 = vld [vmem:[%s449 + $0x40] sm:$0xff]
    %v459 = vld [vmem:[%s449 + $0x48] sm:$0xff]
    %v460 = vld [vmem:[%s449 + $0x50] sm:$0xff]
    %v461 = vld [vmem:[%s449 + $0x58] sm:$0xff]
    %v462 = vld [vmem:[%s449 + $0x60] sm:$0xff]
    %v463 = vld [vmem:[%s449 + $0x68] sm:$0xff]
    %v464 = vld [vmem:[%s449 + $0x70] sm:$0xff]
    %v465 = vld [vmem:[%s449 + $0x78] sm:$0xff]
    %v466 = vld [vmem:[%s2 + $0x1] sm:$0x1]
    %v467 = vlaneseq
    %v468 = vshrl.u32 %v467, 7
    %v469 = vsub.s32 0, %v468
    %v470 = vrot.slane %v466, %v469
    %471 = vmatprep.subr.mxu0 0.0
    %472 = vmatpush1.msra.mxu0 %v465
    %473 = vmatprep.subr.mxu0 0.0
    %474 = vmatpush1.msra.mxu0 %v464
    %475 = vmatprep.subr.mxu0 0.0
    %476 = vmatpush1.msra.mxu0 %v463
    %477 = vmatprep.subr.mxu0 0.0
    %478 = vmatpush1.msra.mxu0 %v462
    %479 = vmatprep.subr.mxu0 0.0
    %480 = vmatpush1.msra.mxu0 %v461
    %481 = vmatprep.subr.mxu0 0.0
    %482 = vmatpush1.msra.mxu0 %v460
    %483 = vmatprep.subr.mxu0 0.0
    %484 = vmatpush1.msra.mxu0 %v459
    %485 = vmatprep.subr.mxu0 0.0
    %486 = vmatpush1.msra.mxu0 %v458
    %487 = vmatprep.subr.mxu0 0.0
    %488 = vmatpush1.msra.mxu0 %v457
    %489 = vmatprep.subr.mxu0 0.0
    %490 = vmatpush1.msra.mxu0 %v456
    %491 = vmatprep.subr.mxu0 0.0
    %492 = vmatpush1.msra.mxu0 %v455
    %493 = vmatprep.subr.mxu0 0.0
    %494 = vmatpush1.msra.mxu0 %v454
    %495 = vmatprep.subr.mxu0 0.0
    %496 = vmatpush1.msra.mxu0 %v453
    %497 = vmatprep.subr.mxu0 0.0
    %498 = vmatpush1.msra.mxu0 %v452
    %499 = vmatprep.subr.mxu0 0.0
    %500 = vmatpush1.msra.mxu0 %v451
    %501 = vmatprep.subr.mxu0 0.0
    %502 = vmatpush1.msra.mxu0 %v450
    %503 = vmatprep.subr.mxu0 0.0
    %504 = vmatpush2.msra.mxu0 0.0
    %505 = vmatprep.subr.mxu0 0.0
    %506 = vmatpush2.msra.mxu0 0.0
    %507 = vmatprep.subr.mxu0 0.0
    %508 = vmatpush2.msra.mxu0 0.0
    %509 = vmatprep.subr.mxu0 0.0
    %510 = vmatpush2.msra.mxu0 0.0
    %511 = vmatprep.subr.mxu0 0.0
    %512 = vmatpush2.msra.mxu0 0.0
    %513 = vmatprep.subr.mxu0 0.0
    %514 = vmatpush2.msra.mxu0 0.0
    %515 = vmatprep.subr.mxu0 0.0
    %516 = vmatpush2.msra.mxu0 0.0
    %517 = vmatprep.subr.mxu0 0.0
    %518 = vmatpush2.msra.mxu0 0.0
    %519 = vmatprep.subr.mxu0 0.0
    %520 = vmatpush2.msra.mxu0 0.0
    %521 = vmatprep.subr.mxu0 0.0
    %522 = vmatpush2.msra.mxu0 0.0
    %523 = vmatprep.subr.mxu0 0.0
    %524 = vmatpush2.msra.mxu0 0.0
    %525 = vmatprep.subr.mxu0 0.0
    %526 = vmatpush2.msra.mxu0 0.0
    %527 = vmatprep.subr.mxu0 0.0
    %528 = vmatpush2.msra.mxu0 0.0
    %529 = vmatprep.subr.mxu0 0.0
    %530 = vmatpush2.msra.mxu0 0.0
    %531 = vmatprep.subr.mxu0 0.0
    %532 = vmatpush2.msra.mxu0 0.0
    %533 = vmatprep.subr.mxu0 0.0
    %534 = vmatpush2.msra.mxu0 0.0
    %535 = vmatprep.mubr.f32.mxu0 0.0
    %536 = vmatmul.mubr.f32.gmra.mxu0 %v433
    %v537 = vpop.f32.mrf.mxu0
    %v538 = vadd.f32 %v470, %v537
    %v539 = vpop.f32.mrf.mxu0
    %540 = vmatprep.mubr.f32.mxu0 0.0
    %541 = vmatmul.mubr.f32.gmra.mxu0 %v434
    %v542 = vpop.f32.mrf.mxu0
    %v543 = vadd.f32 %v470, %v542
    %v544 = vpop.f32.mrf.mxu0
    %545 = vmatprep.mubr.f32.mxu0 0.0
    %546 = vmatmul.mubr.f32.gmra.mxu0 %v435
    %v547 = vpop.f32.mrf.mxu0
    %v548 = vadd.f32 %v470, %v547
    %v549 = vpop.f32.mrf.mxu0
    %550 = vmatprep.mubr.f32.mxu0 0.0
    %551 = vmatmul.mubr.f32.gmra.mxu0 %v436
    %v552 = vpop.f32.mrf.mxu0
    %v553 = vadd.f32 %v470, %v552
    %v554 = vpop.f32.mrf.mxu0
    %555 = vmatprep.mubr.f32.mxu0 0.0
    %556 = vmatmul.mubr.f32.gmra.mxu0 %v437
    %v557 = vpop.f32.mrf.mxu0
    %v558 = vadd.f32 %v470, %v557
    %v559 = vpop.f32.mrf.mxu0
    %560 = vmatprep.mubr.f32.mxu0 0.0
    %561 = vmatmul.mubr.f32.gmra.mxu0 %v438
    %v562 = vpop.f32.mrf.mxu0
    %v563 = vadd.f32 %v470, %v562
    %v564 = vpop.f32.mrf.mxu0
    %565 = vmatprep.mubr.f32.mxu0 0.0
    %566 = vmatmul.mubr.f32.gmra.mxu0 %v439
    %v567 = vpop.f32.mrf.mxu0
    %v568 = vadd.f32 %v470, %v567
    %v569 = vpop.f32.mrf.mxu0
    %570 = vmatprep.mubr.f32.mxu0 0.0
    %571 = vmatmul.mubr.f32.gmra.mxu0 %v440
    %v572 = vpop.f32.mrf.mxu0
    %v573 = vadd.f32 %v470, %v572
    %v574 = vpop.f32.mrf.mxu0
    %575 = vmatprep.mubr.f32.mxu0 0.0
    %576 = vmatmul.mubr.f32.gmra.mxu0 %v441
    %v577 = vpop.f32.mrf.mxu0
    %v578 = vadd.f32 %v470, %v577
    %v579 = vpop.f32.mrf.mxu0
    %580 = vmatprep.mubr.f32.mxu0 0.0
    %581 = vmatmul.mubr.f32.gmra.mxu0 %v442
    %v582 = vpop.f32.mrf.mxu0
    %v583 = vadd.f32 %v470, %v582
    %v584 = vpop.f32.mrf.mxu0
    %585 = vmatprep.mubr.f32.mxu0 0.0
    %586 = vmatmul.mubr.f32.gmra.mxu0 %v443
    %v587 = vpop.f32.mrf.mxu0
    %v588 = vadd.f32 %v470, %v587
    %v589 = vpop.f32.mrf.mxu0
    %590 = vmatprep.mubr.f32.mxu0 0.0
    %591 = vmatmul.mubr.f32.gmra.mxu0 %v444
    %v592 = vpop.f32.mrf.mxu0
    %v593 = vadd.f32 %v470, %v592
    %v594 = vpop.f32.mrf.mxu0
    %595 = vmatprep.mubr.f32.mxu0 0.0
    %596 = vmatmul.mubr.f32.gmra.mxu0 %v445
    %v597 = vpop.f32.mrf.mxu0
    %v598 = vadd.f32 %v470, %v597
    %v599 = vpop.f32.mrf.mxu0
    %600 = vmatprep.mubr.f32.mxu0 0.0
    %601 = vmatmul.mubr.f32.gmra.mxu0 %v446
    %v602 = vpop.f32.mrf.mxu0
    %v603 = vadd.f32 %v470, %v602
    %v604 = vpop.f32.mrf.mxu0
    %605 = vmatprep.mubr.f32.mxu0 0.0
    %606 = vmatmul.mubr.f32.gmra.mxu0 %v447
    %v607 = vpop.f32.mrf.mxu0
    %v608 = vadd.f32 %v470, %v607
    %v609 = vpop.f32.mrf.mxu0
    %610 = vmatprep.mubr.f32.mxu0 0.0
    %611 = vmatmul.mubr.f32.gmra.mxu0 %v448
    %v612 = vpop.f32.mrf.mxu0
    %v613 = vadd.f32 %v470, %v612
    %v614 = vpop.f32.mrf.mxu0
    %615 = vdwg.mxu0
    %v616 = vmul.f32 %v538, 0.5
    %v617 = vmul.f32 %v543, 0.5
    %v618 = vmul.f32 %v548, 0.5
    %v619 = vmul.f32 %v553, 0.5
    %v620 = vmul.f32 %v558, 0.5
    %v621 = vmul.f32 %v563, 0.5
    %v622 = vmul.f32 %v568, 0.5
    %v623 = vmul.f32 %v573, 0.5
    %v624 = vmul.f32 %v578, 0.5
    %v625 = vmul.f32 %v583, 0.5
    %v626 = vmul.f32 %v588, 0.5
    %v627 = vmul.f32 %v593, 0.5
    %v628 = vmul.f32 %v598, 0.5
    %v629 = vmul.f32 %v603, 0.5
    %v630 = vmul.f32 %v608, 0.5
    %v631 = vmul.f32 %v613, 0.5
    %v632 = vmul.f32 %v538, 0.70710677
    %v633 = vmul.f32 %v543, 0.70710677
    %v634 = vmul.f32 %v548, 0.70710677
    %v635 = vmul.f32 %v553, 0.70710677
    %v636 = vmul.f32 %v558, 0.70710677
    %v637 = vmul.f32 %v563, 0.70710677
    %v638 = vmul.f32 %v568, 0.70710677
    %v639 = vmul.f32 %v573, 0.70710677
    %v640 = vmul.f32 %v578, 0.70710677
    %v641 = vmul.f32 %v583, 0.70710677
    %v642 = vmul.f32 %v588, 0.70710677
    %v643 = vmul.f32 %v593, 0.70710677
    %v644 = vmul.f32 %v598, 0.70710677
    %v645 = vmul.f32 %v603, 0.70710677
    %v646 = vmul.f32 %v608, 0.70710677
    %v647 = vmul.f32 %v613, 0.70710677
    %v648 = verf.f32.pop %v632
    %v649 = verf.f32.pop %v633
    %v650 = verf.f32.pop %v634
    %v651 = verf.f32.pop %v635
    %v652 = verf.f32.pop %v636
    %v653 = verf.f32.pop %v637
    %v654 = verf.f32.pop %v638
    %v655 = verf.f32.pop %v639
    %v656 = verf.f32.pop %v640
    %v657 = verf.f32.pop %v641
    %v658 = verf.f32.pop %v642
    %v659 = verf.f32.pop %v643
    %v660 = verf.f32.pop %v644
    %v661 = verf.f32.pop %v645
    %v662 = verf.f32.pop %v646
    %v663 = verf.f32.pop %v647
    %v664 = vadd.f32 %v648, 1.0
    %v665 = vadd.f32 %v649, 1.0
    %v666 = vadd.f32 %v650, 1.0
    %v667 = vadd.f32 %v651, 1.0
    %v668 = vadd.f32 %v652, 1.0
    %v669 = vadd.f32 %v653, 1.0
    %v670 = vadd.f32 %v654, 1.0
    %v671 = vadd.f32 %v655, 1.0
    %v672 = vadd.f32 %v656, 1.0
    %v673 = vadd.f32 %v657, 1.0
    %v674 = vadd.f32 %v658, 1.0
    %v675 = vadd.f32 %v659, 1.0
    %v676 = vadd.f32 %v660, 1.0
    %v677 = vadd.f32 %v661, 1.0
    %v678 = vadd.f32 %v662, 1.0
    %v679 = vadd.f32 %v663, 1.0
    %v680 = vmul.f32 %v616, %v664
    %v681 = vmul.f32 %v617, %v665
    %v682 = vmul.f32 %v618, %v666
    %v683 = vmul.f32 %v619, %v667
    %v684 = vmul.f32 %v620, %v668
    %v685 = vmul.f32 %v621, %v669
    %v686 = vmul.f32 %v622, %v670
    %v687 = vmul.f32 %v623, %v671
    %v688 = vmul.f32 %v624, %v672
    %v689 = vmul.f32 %v625, %v673
    %v690 = vmul.f32 %v626, %v674
    %v691 = vmul.f32 %v627, %v675
    %v692 = vmul.f32 %v628, %v676
    %v693 = vmul.f32 %v629, %v677
    %v694 = vmul.f32 %v630, %v678
    %v695 = vmul.f32 %v631, %v679
    %s696 = scalar_lea.vmem [#allocation2], 256
    %v697 = vld [vmem:[%s696] sm:$0xff]
    %v698 = vld [vmem:[%s696 + $0x8] sm:$0xff]
    %v699 = vld [vmem:[%s696 + $0x10] sm:$0xff]
    %v700 = vld [vmem:[%s696 + $0x18] sm:$0xff]
    %v701 = vld [vmem:[%s696 + $0x20] sm:$0xff]
    %v702 = vld [vmem:[%s696 + $0x28] sm:$0xff]
    %v703 = vld [vmem:[%s696 + $0x30] sm:$0xff]
    %v704 = vld [vmem:[%s696 + $0x38] sm:$0xff]
    %v705 = vld [vmem:[%s696 + $0x40] sm:$0xff]
    %v706 = vld [vmem:[%s696 + $0x48] sm:$0xff]
    %v707 = vld [vmem:[%s696 + $0x50] sm:$0xff]
    %v708 = vld [vmem:[%s696 + $0x58] sm:$0xff]
    %v709 = vld [vmem:[%s696 + $0x60] sm:$0xff]
    %v710 = vld [vmem:[%s696 + $0x68] sm:$0xff]
    %v711 = vld [vmem:[%s696 + $0x70] sm:$0xff]
    %v712 = vld [vmem:[%s696 + $0x78] sm:$0xff]
    %v713 = vld [vmem:[%s2 + $0x2] sm:$0x1]
    %v714 = vlaneseq
    %v715 = vshrl.u32 %v714, 7
    %v716 = vsub.s32 0, %v715
    %v717 = vrot.slane %v713, %v716
    %718 = vmatprep.subr.mxu0 0.0
    %719 = vmatpush1.msra.mxu0 %v712
    %720 = vmatprep.subr.mxu0 0.0
    %721 = vmatpush1.msra.mxu0 %v711
    %722 = vmatprep.subr.mxu0 0.0
    %723 = vmatpush1.msra.mxu0 %v710
    %724 = vmatprep.subr.mxu0 0.0
    %725 = vmatpush1.msra.mxu0 %v709
    %726 = vmatprep.subr.mxu0 0.0
    %727 = vmatpush1.msra.mxu0 %v708
    %728 = vmatprep.subr.mxu0 0.0
    %729 = vmatpush1.msra.mxu0 %v707
    %730 = vmatprep.subr.mxu0 0.0
    %731 = vmatpush1.msra.mxu0 %v706
    %732 = vmatprep.subr.mxu0 0.0
    %733 = vmatpush1.msra.mxu0 %v705
    %734 = vmatprep.subr.mxu0 0.0
    %735 = vmatpush1.msra.mxu0 %v704
    %736 = vmatprep.subr.mxu0 0.0
    %737 = vmatpush1.msra.mxu0 %v703
    %738 = vmatprep.subr.mxu0 0.0
    %739 = vmatpush1.msra.mxu0 %v702
    %740 = vmatprep.subr.mxu0 0.0
    %741 = vmatpush1.msra.mxu0 %v701
    %742 = vmatprep.subr.mxu0 0.0
    %743 = vmatpush1.msra.mxu0 %v700
    %744 = vmatprep.subr.mxu0 0.0
    %745 = vmatpush1.msra.mxu0 %v699
    %746 = vmatprep.subr.mxu0 0.0
    %747 = vmatpush1.msra.mxu0 %v698
    %748 = vmatprep.subr.mxu0 0.0
    %749 = vmatpush1.msra.mxu0 %v697
    %750 = vmatprep.subr.mxu0 0.0
    %751 = vmatpush2.msra.mxu0 0.0
    %752 = vmatprep.subr.mxu0 0.0
    %753 = vmatpush2.msra.mxu0 0.0
    %754 = vmatprep.subr.mxu0 0.0
    %755 = vmatpush2.msra.mxu0 0.0
    %756 = vmatprep.subr.mxu0 0.0
    %757 = vmatpush2.msra.mxu0 0.0
    %758 = vmatprep.subr.mxu0 0.0
    %759 = vmatpush2.msra.mxu0 0.0
    %760 = vmatprep.subr.mxu0 0.0
    %761 = vmatpush2.msra.mxu0 0.0
    %762 = vmatprep.subr.mxu0 0.0
    %763 = vmatpush2.msra.mxu0 0.0
    %764 = vmatprep.subr.mxu0 0.0
    %765 = vmatpush2.msra.mxu0 0.0
    %766 = vmatprep.subr.mxu0 0.0
    %767 = vmatpush2.msra.mxu0 0.0
    %768 = vmatprep.subr.mxu0 0.0
    %769 = vmatpush2.msra.mxu0 0.0
    %770 = vmatprep.subr.mxu0 0.0
    %771 = vmatpush2.msra.mxu0 0.0
    %772 = vmatprep.subr.mxu0 0.0
    %773 = vmatpush2.msra.mxu0 0.0
    %774 = vmatprep.subr.mxu0 0.0
    %775 = vmatpush2.msra.mxu0 0.0
    %776 = vmatprep.subr.mxu0 0.0
    %777 = vmatpush2.msra.mxu0 0.0
    %778 = vmatprep.subr.mxu0 0.0
    %779 = vmatpush2.msra.mxu0 0.0
    %780 = vmatprep.subr.mxu0 0.0
    %781 = vmatpush2.msra.mxu0 0.0
    %782 = vmatprep.mubr.f32.mxu0 0.0
    %783 = vmatmul.mubr.f32.gmra.mxu0 %v680
    %v784 = vpop.f32.mrf.mxu0
    %v785 = vadd.f32 %v717, %v784
    %v786 = vpop.f32.mrf.mxu0
    %787 = vmatprep.mubr.f32.mxu0 0.0
    %788 = vmatmul.mubr.f32.gmra.mxu0 %v681
    %v789 = vpop.f32.mrf.mxu0
    %v790 = vadd.f32 %v717, %v789
    %v791 = vpop.f32.mrf.mxu0
    %792 = vmatprep.mubr.f32.mxu0 0.0
    %793 = vmatmul.mubr.f32.gmra.mxu0 %v682
    %v794 = vpop.f32.mrf.mxu0
    %v795 = vadd.f32 %v717, %v794
    %v796 = vpop.f32.mrf.mxu0
    %797 = vmatprep.mubr.f32.mxu0 0.0
    %798 = vmatmul.mubr.f32.gmra.mxu0 %v683
    %v799 = vpop.f32.mrf.mxu0
    %v800 = vadd.f32 %v717, %v799
    %v801 = vpop.f32.mrf.mxu0
    %802 = vmatprep.mubr.f32.mxu0 0.0
    %803 = vmatmul.mubr.f32.gmra.mxu0 %v684
    %v804 = vpop.f32.mrf.mxu0
    %v805 = vadd.f32 %v717, %v804
    %v806 = vpop.f32.mrf.mxu0
    %807 = vmatprep.mubr.f32.mxu0 0.0
    %808 = vmatmul.mubr.f32.gmra.mxu0 %v685
    %v809 = vpop.f32.mrf.mxu0
    %v810 = vadd.f32 %v717, %v809
    %v811 = vpop.f32.mrf.mxu0
    %812 = vmatprep.mubr.f32.mxu0 0.0
    %813 = vmatmul.mubr.f32.gmra.mxu0 %v686
    %v814 = vpop.f32.mrf.mxu0
    %v815 = vadd.f32 %v717, %v814
    %v816 = vpop.f32.mrf.mxu0
    %817 = vmatprep.mubr.f32.mxu0 0.0
    %818 = vmatmul.mubr.f32.gmra.mxu0 %v687
    %v819 = vpop.f32.mrf.mxu0
    %v820 = vadd.f32 %v717, %v819
    %v821 = vpop.f32.mrf.mxu0
    %822 = vmatprep.mubr.f32.mxu0 0.0
    %823 = vmatmul.mubr.f32.gmra.mxu0 %v688
    %v824 = vpop.f32.mrf.mxu0
    %v825 = vadd.f32 %v717, %v824
    %v826 = vpop.f32.mrf.mxu0
    %827 = vmatprep.mubr.f32.mxu0 0.0
    %828 = vmatmul.mubr.f32.gmra.mxu0 %v689
    %v829 = vpop.f32.mrf.mxu0
    %v830 = vadd.f32 %v717, %v829
    %v831 = vpop.f32.mrf.mxu0
    %832 = vmatprep.mubr.f32.mxu0 0.0
    %833 = vmatmul.mubr.f32.gmra.mxu0 %v690
    %v834 = vpop.f32.mrf.mxu0
    %v835 = vadd.f32 %v717, %v834
    %v836 = vpop.f32.mrf.mxu0
    %837 = vmatprep.mubr.f32.mxu0 0.0
    %838 = vmatmul.mubr.f32.gmra.mxu0 %v691
    %v839 = vpop.f32.mrf.mxu0
    %v840 = vadd.f32 %v717, %v839
    %v841 = vpop.f32.mrf.mxu0
    %842 = vmatprep.mubr.f32.mxu0 0.0
    %843 = vmatmul.mubr.f32.gmra.mxu0 %v692
    %v844 = vpop.f32.mrf.mxu0
    %v845 = vadd.f32 %v717, %v844
    %v846 = vpop.f32.mrf.mxu0
    %847 = vmatprep.mubr.f32.mxu0 0.0
    %848 = vmatmul.mubr.f32.gmra.mxu0 %v693
    %v849 = vpop.f32.mrf.mxu0
    %v850 = vadd.f32 %v717, %v849
    %v851 = vpop.f32.mrf.mxu0
    %852 = vmatprep.mubr.f32.mxu0 0.0
    %853 = vmatmul.mubr.f32.gmra.mxu0 %v694
    %v854 = vpop.f32.mrf.mxu0
    %v855 = vadd.f32 %v717, %v854
    %v856 = vpop.f32.mrf.mxu0
    %857 = vmatprep.mubr.f32.mxu0 0.0
    %858 = vmatmul.mubr.f32.gmra.mxu0 %v695
    %v859 = vpop.f32.mrf.mxu0
    %v860 = vadd.f32 %v717, %v859
    %v861 = vpop.f32.mrf.mxu0
    %862 = vdwg.mxu0
    %v863 = vmul.f32 %v785, 0.5
    %v864 = vmul.f32 %v790, 0.5
    %v865 = vmul.f32 %v795, 0.5
    %v866 = vmul.f32 %v800, 0.5
    %v867 = vmul.f32 %v805, 0.5
    %v868 = vmul.f32 %v810, 0.5
    %v869 = vmul.f32 %v815, 0.5
    %v870 = vmul.f32 %v820, 0.5
    %v871 = vmul.f32 %v825, 0.5
    %v872 = vmul.f32 %v830, 0.5
    %v873 = vmul.f32 %v835, 0.5
    %v874 = vmul.f32 %v840, 0.5
    %v875 = vmul.f32 %v845, 0.5
    %v876 = vmul.f32 %v850, 0.5
    %v877 = vmul.f32 %v855, 0.5
    %v878 = vmul.f32 %v860, 0.5
    %v879 = vmul.f32 %v785, 0.70710677
    %v880 = vmul.f32 %v790, 0.70710677
    %v881 = vmul.f32 %v795, 0.70710677
    %v882 = vmul.f32 %v800, 0.70710677
    %v883 = vmul.f32 %v805, 0.70710677
    %v884 = vmul.f32 %v810, 0.70710677
    %v885 = vmul.f32 %v815, 0.70710677
    %v886 = vmul.f32 %v820, 0.70710677
    %v887 = vmul.f32 %v825, 0.70710677
    %v888 = vmul.f32 %v830, 0.70710677
    %v889 = vmul.f32 %v835, 0.70710677
    %v890 = vmul.f32 %v840, 0.70710677
    %v891 = vmul.f32 %v845, 0.70710677
    %v892 = vmul.f32 %v850, 0.70710677
    %v893 = vmul.f32 %v855, 0.70710677
    %v894 = vmul.f32 %v860, 0.70710677
    %v895 = verf.f32.pop %v879
    %v896 = verf.f32.pop %v880
    %v897 = verf.f32.pop %v881
    %v898 = verf.f32.pop %v882
    %v899 = verf.f32.pop %v883
    %v900 = verf.f32.pop %v884
    %v901 = verf.f32.pop %v885
    %v902 = verf.f32.pop %v886
    %v903 = verf.f32.pop %v887
    %v904 = verf.f32.pop %v888
    %v905 = verf.f32.pop %v889
    %v906 = verf.f32.pop %v890
    %v907 = verf.f32.pop %v891
    %v908 = verf.f32.pop %v892
    %v909 = verf.f32.pop %v893
    %v910 = verf.f32.pop %v894
    %v911 = vadd.f32 %v895, 1.0
    %v912 = vadd.f32 %v896, 1.0
    %v913 = vadd.f32 %v897, 1.0
    %v914 = vadd.f32 %v898, 1.0
    %v915 = vadd.f32 %v899, 1.0
    %v916 = vadd.f32 %v900, 1.0
    %v917 = vadd.f32 %v901, 1.0
    %v918 = vadd.f32 %v902, 1.0
    %v919 = vadd.f32 %v903, 1.0
    %v920 = vadd.f32 %v904, 1.0
    %v921 = vadd.f32 %v905, 1.0
    %v922 = vadd.f32 %v906, 1.0
    %v923 = vadd.f32 %v907, 1.0
    %v924 = vadd.f32 %v908, 1.0
    %v925 = vadd.f32 %v909, 1.0
    %v926 = vadd.f32 %v910, 1.0
    %v927 = vmul.f32 %v863, %v911
    %v928 = vmul.f32 %v864, %v912
    %v929 = vmul.f32 %v865, %v913
    %v930 = vmul.f32 %v866, %v914
    %v931 = vmul.f32 %v867, %v915
    %v932 = vmul.f32 %v868, %v916
    %v933 = vmul.f32 %v869, %v917
    %v934 = vmul.f32 %v870, %v918
    %v935 = vmul.f32 %v871, %v919
    %v936 = vmul.f32 %v872, %v920
    %v937 = vmul.f32 %v873, %v921
    %v938 = vmul.f32 %v874, %v922
    %v939 = vmul.f32 %v875, %v923
    %v940 = vmul.f32 %v876, %v924
    %v941 = vmul.f32 %v877, %v925
    %v942 = vmul.f32 %v878, %v926
    %s943 = scalar_lea.vmem [#allocation2], 384
    %v944 = vld [vmem:[%s943] sm:$0xff]
    %v945 = vld [vmem:[%s2 + $0x3] sm:$0x1]
    %s947 = vtos %v945
    %v948 = vstv %s947
    %950 = vmatprep.subr.mxu0 0.0
    %951 = vmatpush1.xpose.msra.mxu0 %v942
    %952 = vmatprep.subr.mxu0 0.0
    %953 = vmatpush1.xpose.msra.mxu0 %v941
    %954 = vmatprep.subr.mxu0 0.0
    %955 = vmatpush1.xpose.msra.mxu0 %v940
    %956 = vmatprep.subr.mxu0 0.0
    %957 = vmatpush1.xpose.msra.mxu0 %v939
    %958 = vmatprep.subr.mxu0 0.0
    %959 = vmatpush1.xpose.msra.mxu0 %v938
    %960 = vmatprep.subr.mxu0 0.0
    %961 = vmatpush1.xpose.msra.mxu0 %v937
    %962 = vmatprep.subr.mxu0 0.0
    %963 = vmatpush1.xpose.msra.mxu0 %v936
    %964 = vmatprep.subr.mxu0 0.0
    %965 = vmatpush1.xpose.msra.mxu0 %v935
    %966 = vmatprep.subr.mxu0 0.0
    %967 = vmatpush1.xpose.msra.mxu0 %v934
    %968 = vmatprep.subr.mxu0 0.0
    %969 = vmatpush1.xpose.msra.mxu0 %v933
    %970 = vmatprep.subr.mxu0 0.0
    %971 = vmatpush1.xpose.msra.mxu0 %v932
    %972 = vmatprep.subr.mxu0 0.0
    %973 = vmatpush1.xpose.msra.mxu0 %v931
    %974 = vmatprep.subr.mxu0 0.0
    %975 = vmatpush1.xpose.msra.mxu0 %v930
    %976 = vmatprep.subr.mxu0 0.0
    %977 = vmatpush1.xpose.msra.mxu0 %v929
    %978 = vmatprep.subr.mxu0 0.0
    %979 = vmatpush1.xpose.msra.mxu0 %v928
    %980 = vmatprep.subr.mxu0 0.0
    %981 = vmatpush1.xpose.msra.mxu0 %v927
    %982 = vmatprep.subr.mxu0 0.0
    %983 = vmatpush2.xpose.msra.mxu0 0.0
    %984 = vmatprep.subr.mxu0 0.0
    %985 = vmatpush2.xpose.msra.mxu0 0.0
    %986 = vmatprep.subr.mxu0 0.0
    %987 = vmatpush2.xpose.msra.mxu0 0.0
    %988 = vmatprep.subr.mxu0 0.0
    %989 = vmatpush2.xpose.msra.mxu0 0.0
    %990 = vmatprep.subr.mxu0 0.0
    %991 = vmatpush2.xpose.msra.mxu0 0.0
    %992 = vmatprep.subr.mxu0 0.0
    %993 = vmatpush2.xpose.msra.mxu0 0.0
    %994 = vmatprep.subr.mxu0 0.0
    %995 = vmatpush2.xpose.msra.mxu0 0.0
    %996 = vmatprep.subr.mxu0 0.0
    %997 = vmatpush2.xpose.msra.mxu0 0.0
    %998 = vmatprep.subr.mxu0 0.0
    %999 = vmatpush2.xpose.msra.mxu0 0.0
    %1000 = vmatprep.subr.mxu0 0.0
    %1001 = vmatpush2.xpose.msra.mxu0 0.0
    %1002 = vmatprep.subr.mxu0 0.0
    %1003 = vmatpush2.xpose.msra.mxu0 0.0
    %1004 = vmatprep.subr.mxu0 0.0
    %1005 = vmatpush2.xpose.msra.mxu0 0.0
    %1006 = vmatprep.subr.mxu0 0.0
    %1007 = vmatpush2.xpose.msra.mxu0 0.0
    %1008 = vmatprep.subr.mxu0 0.0
    %1009 = vmatpush2.xpose.msra.mxu0 0.0
    %1010 = vmatprep.subr.mxu0 0.0
    %1011 = vmatpush2.xpose.msra.mxu0 0.0
    %1012 = vmatprep.subr.mxu0 0.0
    %1013 = vmatpush2.xpose.msra.mxu0 0.0
    %1014 = vmatprep.mubr.f32.mxu0 0.0
    %1015 = vmatmul.mubr.f32.gmra.mxu0 %v944
    %v1016 = vpop.f32.mrf.mxu0
    %v1017 = vadd.f32 %v948, %v1016
    %v1018 = vpop.f32.mrf.mxu0
    %1019 = vdwg.mxu0
    %1020 = vst [vmem:[#allocation5] sm:$0xff] %v1017
    // Predicated region
    $region18: #{tpu_custom_call.1} parent=1 // pred_check
      _
    $region19: #{tpu_custom_call.1} parent=1 // pred_check_branch
      %1022 = sbr.rel (0) target = $region21
    $region20: #{tpu_custom_call.1} parent=1 // pred_region
      %s1024 = ssub.s32 128, 128
      %1025 = vsyncadd [#allocation4], %s1024
      %s1027 = sshll.u32 [#allocation5], 4
      %s1028 = int_to_ptr.vmem [resolvable:$true] %s1027
      %1030 = dma.vmem_to_hbm [thread:$0]  %s1028, 128, %s3, [#allocation4]
    $region21: #{tpu_custom_call.1} parent=1 // pred_fallthru
      _
    // Predicated region
    $region22: #{tpu_custom_call.1} parent=1 // pred_check
      _
    $region23: #{tpu_custom_call.1} parent=1 // pred_check_branch
      %1032 = sbr.rel (0) target = $region25
    $region24: #{tpu_custom_call.1} parent=1 // pred_region
      %1033 = dma.done [#allocation4], 128
    $region25: #{tpu_custom_call.1} parent=1 // pred_fallthru
      _
    %1034 = vsyncpa [#allocation3], 1
    %1035 = vsyncpa [#allocation4], 1

</llo_original>
